<compile_context>
chip_gen: v7x
topology: tpu7x:2x2x1
jax: 0.10.0
libtpu: 0.0.40
codegen_flags: <defaults>
</compile_context>

<pallas_src>
import math

import jax
import jax.numpy as jnp
import numpy as np
from jax import lax
from jax.experimental import pallas as pl
from jax.experimental.pallas import tpu as pltpu


def _round_up(x, m):
    return (x + m - 1) // m * m


# ----------------------------- Pallas kernel --------------------------------
def _proj_kernel(xcol_ref, w_ref, b_ref, o_ref):
    # Activations arrive f32 straight from im2col; cast to bf16 in VMEM (no
    # separate XLA cast/pad pass over HBM), f32 MXU accumulation, f32 bias,
    # single cast on the lane-dense (Oc padded to 128) store.
    x = xcol_ref[...].astype(jnp.bfloat16)
    acc = jnp.dot(x, w_ref[...], preferred_element_type=jnp.float32)
    o_ref[...] = (acc + b_ref[...]).astype(o_ref.dtype)


def _vmem_budget_bytes():
    """~3/8 of physical VMEM: ~48 MiB on v5e/v6e (128 MiB parts), ~24 MiB on
    v7x (64 MiB).  Conservative fallback if the trace-time query fails."""
    cap = None
    try:
        info = pltpu.get_tpu_info()
        for name in ("vmem_capacity_bytes", "vmem_bytes", "vmem_size_bytes"):
            cap = getattr(info, name, None)
            if cap:
                break
    except Exception:
        cap = None
    if not cap:
        cap = 64 << 20  # assume the smallest (v7x per-TensorCore) VMEM
    return (3 * int(cap)) // 8


def _choose_tm(M, Kd, Oc_p, in_itemsize, out_itemsize, budget_bytes):
    """Pick the largest TM whose live VMEM footprint fits the budget, then
    shrink so a non-trivial problem still yields >= 2 grid steps (v7x
    megacore).  Returns (TM, estimated_live_bytes)."""
    w_resident = 2 * (Kd * Oc_p * 2 + Oc_p * 4)      # weight+bias, worst case

    def live(tm):
        return (2 * tm * Kd * in_itemsize            # double-buffered input tiles
                + tm * Kd * 2                        # in-kernel bf16 cast temp
                + 2 * tm * Oc_p * out_itemsize       # double-buffered output tiles
                + tm * Oc_p * 4)                     # f32 accumulator temp

    avail = int(0.85 * budget_bytes) - w_resident
    tm = 4096                                        # 2048-4096 amortizes the
    while tm > 256 and live(tm) > avail:             # ~0.35us per-step overhead
        tm //= 2
    if tm >= M:
        tm = M                                       # full-dim block is always legal
    if M > 16 and pl.cdiv(M, tm) < 2:                # keep both v7x cores busy
        tm = max(8, _round_up(pl.cdiv(M, 2), 8))
    return tm, live(tm) + w_resident


def _pallas_proj(xcol, w_mat, bias, out_dtype):
    """xcol: (M, Kd) f32/bf16, w_mat: (Kd, Oc), bias: (Oc,) -> (M, Oc).

    Single MXU matmul + bias kernel, streamed over M with a parallel grid.
    Weight/bias stay resident in VMEM (constant index_maps); Kd is unpadded;
    Oc is padded to a 128 multiple for lane-dense stores.
    """
    M, Kd = xcol.shape
    Oc = w_mat.shape[1]
    Oc_p = _round_up(Oc, 128)

    out_itemsize = jnp.dtype(out_dtype).itemsize
    budget = _vmem_budget_bytes()
    TM, est_vmem = _choose_tm(M, Kd, Oc_p, xcol.dtype.itemsize, out_itemsize, budget)

    # Weight is tiny: one cast (+ Oc pad if needed) is the only pre-pass on it.
    w_b16 = w_mat.astype(jnp.bfloat16)
    if Oc_p != Oc:
        w_b16 = jnp.zeros((Kd, Oc_p), jnp.bfloat16).at[:, :Oc].set(w_b16)
    b_p = jnp.zeros((1, Oc_p), jnp.float32).at[0, :Oc].set(bias.astype(jnp.float32))

    # Single-buffer the resident weight/bias only when double-buffering them
    # would actually eat into the VMEM budget (matters for ViT-L-scale Kd*Oc
    # under v7x's 64 MiB ceiling; irrelevant for tiny weights).
    if Kd * Oc_p * 2 >= (2 << 20):
        w_spec = pl.BlockSpec((Kd, Oc_p), lambda i: (0, 0),
                              pipeline_mode=pl.Buffered(1))
        b_spec = pl.BlockSpec((1, Oc_p), lambda i: (0, 0),
                              pipeline_mode=pl.Buffered(1))
    else:
        w_spec = pl.BlockSpec((Kd, Oc_p), lambda i: (0, 0))
        b_spec = pl.BlockSpec((1, Oc_p), lambda i: (0, 0))

    grid = (pl.cdiv(M, TM),)   # no M padding; partial last block is masked

    out = pl.pallas_call(
        _proj_kernel,
        out_shape=jax.ShapeDtypeStruct((M, Oc_p), out_dtype),
        grid=grid,
        in_specs=[
            pl.BlockSpec((TM, Kd), lambda i: (i, 0)),   # streamed, true Kd
            w_spec,                                     # resident weight
            b_spec,                                     # resident bias
        ],
        out_specs=pl.BlockSpec((TM, Oc_p), lambda i: (i, 0)),
        compiler_params=pltpu.CompilerParams(
            dimension_semantics=("parallel",),
            vmem_limit_bytes=int(max(budget, est_vmem + (4 << 20))),
        ),
    )(xcol, w_b16, b_p)

    return out if Oc_p == Oc else out[:, :Oc]


# ------------------------------- glue (JAX) ----------------------------------
def _im2col_nonoverlap_nchw(x, K):
    """Non-overlapping (stride == kernel) patches, NCHW input.  Pure reshape
    + transpose (single XLA pass, no gather).  Flat order (C, Kh, Kw) matches
    weight.reshape(Oc, C*K*K)."""
    B, C, H, W = x.shape
    Ho, Wo = H // K, W // K
    p = x.reshape(B, C, Ho, K, Wo, K)
    p = p.transpose(0, 2, 4, 1, 3, 5)              # (B, Ho, Wo, C, Kh, Kw)
    return p.reshape(B * Ho * Wo, C * K * K), Ho, Wo


def _im2col_nonoverlap_nhwc(x, K):
    """Non-overlapping patches from channel-last input (token path) — avoids
    the big NCHW transpose; flat order is (Kh, Kw, C)."""
    B, H, W, C = x.shape
    Ho, Wo = H // K, W // K
    p = x.reshape(B, Ho, K, Wo, K, C)
    p = p.transpose(0, 1, 3, 2, 4, 5)              # (B, Ho, Wo, Kh, Kw, C)
    return p.reshape(B * Ho * Wo, K * K * C), Ho, Wo


def _im2col_overlap_nchw(x, K, S):
    """General-stride fallback (overlapping patches), NCHW input.  Uses
    lax.conv_general_dilated_patches (identity-kernel grouped conv) — no
    fancy-index gather.  Output channel order is (C, Kh, Kw)."""
    B = x.shape[0]
    patches = lax.conv_general_dilated_patches(
        x, filter_shape=(K, K), window_strides=(S, S), padding="VALID",
        dimension_numbers=("NCHW", "OIHW", "NCHW"))
    _, Kd, Ho, Wo = patches.shape
    xcol = patches.transpose(0, 2, 3, 1).reshape(B * Ho * Wo, Kd)
    return xcol, Ho, Wo


def patch_embedding_forward(x, weight, bias, kernel_size, stride):
    """Equivalent of PatchEmbedding.forward.

    x: (B, C, H, W)  or  (B, N, C) with N a perfect square.
    weight: (Oc, C, K, K)   bias: (Oc,)
    returns: (B, Ho*Wo, Oc)   (== rearrange(conv(x), 'b c h w -> b (h w) c'))
    """
    Oc = weight.shape[0]
    K, S = kernel_size, stride
    out_dtype = x.dtype

    if x.ndim == 3:
        B, N, C = x.shape
        H = W = int(math.isqrt(N))
        assert H * W == N, "token input requires a perfect-square token count"
        x_nhwc = x.reshape(B, H, W, C)             # 'b (h w) c -> b h w c'
        if S == K and H % K == 0 and W % K == 0:
            # Channel-last patches; permute the weight once instead of x.
            xcol, Ho, Wo = _im2col_nonoverlap_nhwc(x_nhwc, K)
            w_mat = weight.transpose(0, 2, 3, 1).reshape(Oc, K * K * C).T
        else:
            xcol, Ho, Wo = _im2col_overlap_nchw(
                x_nhwc.transpose(0, 3, 1, 2), K, S)
            w_mat = weight.reshape(Oc, C * K * K).T
    else:
        B, C, H, W = x.shape
        if S == K and H % K == 0 and W % K == 0:
            xcol, Ho, Wo = _im2col_nonoverlap_nchw(x, K)
        else:
            xcol, Ho, Wo = _im2col_overlap_nchw(x, K, S)
        w_mat = weight.reshape(Oc, C * K * K).T

    out = _pallas_proj(xcol, w_mat, bias, out_dtype)  # (B*Ho*Wo, Oc)
    return out.reshape(B, Ho * Wo, Oc)


# --------------------------------- demo --------------------------------------
if __name__ == "__main__":
    # Small shapes: B=2, C=4, H=W=16, patch kernel=stride=4, out_channels=32.
    B, C, H, W = 2, 4, 16, 16
    Oc, K, S = 32, 4, 4

    key = jax.random.PRNGKey(0)
    kx, kw, kb = jax.random.split(key, 3)
    x = jax.random.normal(kx, (B, C, H, W), dtype=jnp.float32)

    fan_in = C * K * K
    bound = 1.0 / math.sqrt(fan_in)
    weight = jax.random.uniform(kw, (Oc, C, K, K), jnp.float32, -bound, bound)
    bias = jax.random.uniform(kb, (Oc,), jnp.float32, -bound, bound)

    def ref_conv(x_nchw, stride):
        r = lax.conv_general_dilated(
            x_nchw, weight, window_strides=(stride, stride), padding="VALID",
            dimension_numbers=("NCHW", "OIHW", "NCHW"),
        ) + bias[None, :, None, None]
        return r.transpose(0, 2, 3, 1).reshape(B, -1, Oc)  # 'b c h w -> b (h w) c'

    # 1) NCHW input, stride == kernel (patch-embed path).  bf16 MXU operands
    #    -> looser tolerance than pure f32.
    out = jax.block_until_ready(patch_embedding_forward(x, weight, bias, K, S))
    ref = ref_conv(x, S)
    assert out.shape == ref.shape
    assert np.allclose(np.asarray(out), np.asarray(ref), atol=2e-2, rtol=2e-2)

    # 2) (B, N, C) token-input branch (channel-last path).
    x_tok = x.transpose(0, 2, 3, 1).reshape(B, H * W, C)
    out_tok = jax.block_until_ready(
        patch_embedding_forward(x_tok, weight, bias, K, S))
    assert np.allclose(np.asarray(out_tok), np.asarray(ref),
                       atol=2e-2, rtol=2e-2)

    # 3) Overlapping-stride fallback (conv_general_dilated_patches path) —
    #    also exercises the masked partial last M-block.
    out_ov = jax.block_until_ready(
        patch_embedding_forward(x, weight, bias, K, 2))
    ref_ov = ref_conv(x, 2)
    assert out_ov.shape == ref_ov.shape
    assert np.allclose(np.asarray(out_ov), np.asarray(ref_ov),
                       atol=2e-2, rtol=2e-2)

    print("KERNEL_OK")
</pallas_src>

<mosaic_0001>
module attributes {stable_mosaic.version = 11 : i64} {
  func.func @_proj_kernel(%arg0: i32, %arg1: memref<16x64xf32, #tpu.memory_space<vmem>>, %arg2: memref<64x128xbf16, #tpu.memory_space<vmem>>, %arg3: memref<1x128xf32, #tpu.memory_space<vmem>>, %arg4: memref<16x128xf32, #tpu.memory_space<vmem>>) attributes {dimension_semantics = [#tpu.dimension_semantics<parallel>], iteration_bounds = array<i64: 2>, scalar_prefetch = 0 : i64, scratch_operands = 0 : i64, tpu.core_type = #tpu.core_type<tc>, window_params = [{transform_indices = @transform_0, window_bounds = array<i64: 16, 64>}, {pipeline_mode = #tpu.pipeline_mode<synchronous>, transform_indices = @transform_1, window_bounds = array<i64: 64, 128>}, {pipeline_mode = #tpu.pipeline_mode<synchronous>, transform_indices = @transform_2, window_bounds = array<i64: 1, 128>}, {transform_indices = @transform_3, window_bounds = array<i64: 16, 128>}]} {
    %c0 = arith.constant 0 : index
    %c0_0 = arith.constant 0 : index
    %0 = vector.load %arg1[%c0, %c0_0] : memref<16x64xf32, #tpu.memory_space<vmem>>, vector<16x64xf32>
    %1 = arith.truncf %0 : vector<16x64xf32> to vector<16x64xbf16>
    %c0_1 = arith.constant 0 : index
    %c0_2 = arith.constant 0 : index
    %2 = vector.load %arg2[%c0_1, %c0_2] : memref<64x128xbf16, #tpu.memory_space<vmem>>, vector<64x128xbf16>
    %cst = arith.constant dense<0.000000e+00> : vector<16x128xf32>
    %3 = tpu.matmul %1, %2, %cst {dimension_numbers = #tpu.dot_dimension_numbers<[1], [0], [0], [1], [0, 0, 1, 1], [], []>} : vector<16x64xbf16>, vector<64x128xbf16>, vector<16x128xf32> -> vector<16x128xf32>
    %c0_3 = arith.constant 0 : index
    %c0_4 = arith.constant 0 : index
    %4 = vector.load %arg3[%c0_3, %c0_4] : memref<1x128xf32, #tpu.memory_space<vmem>>, vector<1x128xf32>
    %5 = vector.broadcast %4 : vector<1x128xf32> to vector<16x128xf32>
    %6 = arith.addf %3, %5 : vector<16x128xf32>
    %c0_5 = arith.constant 0 : index
    %c0_6 = arith.constant 0 : index
    %7 = vector.load %arg4[%c0_5, %c0_6] : memref<16x128xf32, #tpu.memory_space<vmem>>, vector<16x128xf32>
    tpu.vector_store %arg4[%c0_5, %c0_6], %6 {strides = array<i32>} : memref<16x128xf32, #tpu.memory_space<vmem>>, vector<16x128xf32>,
    return
  }
  func.func @transform_0(%arg0: i32) -> (i32, i32) {
    %c0_i32 = arith.constant 0 : i32
    %c0_i32_0 = arith.constant 0 : i32
    return %arg0, %c0_i32 : i32, i32
  }
  func.func @transform_1(%arg0: i32) -> (i32, i32) {
    %c0_i32 = arith.constant 0 : i32
    %c0_i32_0 = arith.constant 0 : i32
    %c0_i32_1 = arith.constant 0 : i32
    return %c0_i32, %c0_i32_0 : i32, i32
  }
  func.func @transform_2(%arg0: i32) -> (i32, i32) {
    %c0_i32 = arith.constant 0 : i32
    %c0_i32_0 = arith.constant 0 : i32
    %c0_i32_1 = arith.constant 0 : i32
    return %c0_i32, %c0_i32_0 : i32, i32
  }
  func.func @transform_3(%arg0: i32) -> (i32, i32) {
    %c0_i32 = arith.constant 0 : i32
    %c0_i32_0 = arith.constant 0 : i32
    return %arg0, %c0_i32 : i32, i32
  }
}

</mosaic_0001>

<llo_original>
// kernel: tpu_custom_call.1
$region0: #{tpu_custom_call.1}
  #allocation0 [shape = 'u32[]', space=smem, size = 0x4, offset = 0x4, fixed_abs, tag = 'smem constant byte address 0x4 - core index']
  #allocation1 [shape = 'u32[144,128]{1,0:T(1,128)}', space=vmem, size = 0x12000, scoped, tag = 'internal scratch']
  %s0 = inlined_call_operand.hbm [shape: f32[32,64], index: 0, kind: input, shape index: {}]
  %s1 = inlined_call_operand.hbm [shape: bf16[64,128], index: 1, kind: input, shape index: {}]
  %s2 = inlined_call_operand.vmem [shape: f32[1,128], index: 2, kind: input, shape index: {}]
  %s3 = inlined_call_operand.hbm [shape: f32[32,128], index: 3, kind: output, shape index: {}]
  %s4 = sld [smem:[#allocation0]]
  $region53: #{tpu_custom_call.1} parent=0
    _
  %s6 = ssub.s32 1, %s4
  %s7 = scalar_select 0, %s6, %s4
  $region1: #{tpu_custom_call.1} parent=0
    #allocation2 [shape = 'u8[16384]{0}', space=vmem, size = 0x4000, scoped, tag = 'input window, operand 0']
    #allocation3 [shape = 's32[2]{0}', space=sflag, size = 0x8, scoped, tag = 'scoped memory for tpu_custom_call.1']
    #allocation4 [shape = 's32[2]{0}', space=sflag, size = 0x8, scoped, tag = 'scoped memory for tpu_custom_call.1']
    #allocation5 [shape = 'u8[16384]{0}', space=vmem, size = 0x4000, scoped, tag = 'input window, operand 1, single buffered']
    #allocation6 [shape = 's32[1]{0}', space=sflag, size = 0x4, scoped, tag = 'scoped memory for tpu_custom_call.1']
    #allocation7 [shape = 'u8[16384]{0}', space=vmem, size = 0x4000, scoped, tag = 'output window, operand 0']
    %8 = vsyncpa [#allocation3], 0
    %s9 = scalar_lea.sflag [#allocation3], 1
    %10 = vsyncpa %s9, 0
    %11 = vsyncpa [#allocation6], 0
    %12 = vsyncpa [#allocation4], 0
    %s13 = scalar_lea.sflag [#allocation4], 1
    %14 = vsyncpa %s13, 0
    loop: start=0, step=1, limit=4
    $region2: #{tpu_custom_call.1} parent=1 // loop_pre_header
      _
    $region3: #{tpu_custom_call.1} parent=1 // loop_header
      %s16 = sphi 0, %s20
      %p17 = scmp.ge.s32.totalorder %s16, 4
      %s26 = sphi 0, %s28
      %s29 = sphi 0, %s26
      %s30 = sphi 0, %s29
      %s46 = sphi 0, %s30
      %s50 = sphi 0, %s50
      %s52 = sphi 0, %s50
      %s53 = sphi 0, %s52
      %s67 = sphi 0, %s53
      %s71 = sphi 0, %s71
      %s73 = sphi 0, %s71
      %s74 = sphi 0, %s73
      %s88 = sphi 0, %s74
      %s94 = sphi 0, %s96
      %s97 = sphi 0, %s94
      %s98 = sphi 0, %s97
      %s114 = sphi 0, %s98
    $region4: #{tpu_custom_call.1} parent=1 // loop_header_branch
      %19 = sbr.rel (%p17) target = $region8
    $region5: #{tpu_custom_call.1} parent=1 // loop_body
      %s21 = ssub.s32 %s16, 1
      %s22 = ssub.s32 %s16, 2
      %s23 = sadd.s32 %s16, 1
      %s24 = ssub.s32 %s16, %s23
      %p25 = scmp.eq.s32.totalorder %s24, 0
      %s27 = sadd.s32 %s26, 1
      %s28 = scalar_select %p25, %s26, %s27
      %p31 = pneg %p25
      %p32 = scmp.eq.s32.totalorder %s16, 1
      %p33 = por %p31, %p32
      %p34 = scmp.ne.s32.totalorder %s26, %s29
      %p35 = scmp.eq.s32.totalorder %s16, 0
      %p36 = por %p34, %p35
      %p37 = scmp.ne.s32.totalorder %s26, %s29
      %p38 = scmp.eq.s32.totalorder %s21, 1
      %p39 = por %p37, %p38
      %p40 = scmp.ne.s32.totalorder %s29, %s30
      %p41 = scmp.eq.s32.totalorder %s21, 0
      %p42 = por %p40, %p41
      %p43 = scmp.ne.s32.totalorder %s29, %s30
      %p44 = scmp.eq.s32.totalorder %s22, 1
      %p45 = por %p43, %p44
      %p47 = scmp.ne.s32.totalorder %s30, %s46
      %p48 = scmp.eq.s32.totalorder %s22, 0
      %p49 = por %p47, %p48
      %s51 = sadd.s32 %s50, 1
      %p54 = scmp.eq.s32.totalorder %s16, 1
      %p55 = scmp.ne.s32.totalorder %s50, %s52
      %p56 = scmp.eq.s32.totalorder %s16, 0
      %p57 = por %p55, %p56
      %p58 = scmp.ne.s32.totalorder %s50, %s52
      %p59 = scmp.eq.s32.totalorder %s21, 1
      %p60 = por %p58, %p59
      %p61 = scmp.ne.s32.totalorder %s52, %s53
      %p62 = scmp.eq.s32.totalorder %s21, 0
      %p63 = por %p61, %p62
      %p64 = scmp.ne.s32.totalorder %s52, %s53
      %p65 = scmp.eq.s32.totalorder %s22, 1
      %p66 = por %p64, %p65
      %p68 = scmp.ne.s32.totalorder %s53, %s67
      %p69 = scmp.eq.s32.totalorder %s22, 0
      %p70 = por %p68, %p69
      %s72 = sadd.s32 %s71, 1
      %p75 = scmp.eq.s32.totalorder %s16, 1
      %p76 = scmp.ne.s32.totalorder %s71, %s73
      %p77 = scmp.eq.s32.totalorder %s16, 0
      %p78 = por %p76, %p77
      %p79 = scmp.ne.s32.totalorder %s71, %s73
      %p80 = scmp.eq.s32.totalorder %s21, 1
      %p81 = por %p79, %p80
      %p82 = scmp.ne.s32.totalorder %s73, %s74
      %p83 = scmp.eq.s32.totalorder %s21, 0
      %p84 = por %p82, %p83
      %p85 = scmp.ne.s32.totalorder %s73, %s74
      %p86 = scmp.eq.s32.totalorder %s22, 1
      %p87 = por %p85, %p86
      %p89 = scmp.ne.s32.totalorder %s74, %s88
      %p90 = scmp.eq.s32.totalorder %s22, 0
      %p91 = por %p89, %p90
      %s92 = ssub.s32 %s16, %s23
      %p93 = scmp.eq.s32.totalorder %s92, 0
      %s95 = sadd.s32 %s94, 1
      %s96 = scalar_select %p93, %s94, %s95
      %p99 = pneg %p93
      %p100 = scmp.eq.s32.totalorder %s16, 1
      %p101 = por %p99, %p100
      %p102 = scmp.ne.s32.totalorder %s94, %s97
      %p103 = scmp.eq.s32.totalorder %s16, 0
      %p104 = por %p102, %p103
      %p105 = scmp.ne.s32.totalorder %s94, %s97
      %p106 = scmp.eq.s32.totalorder %s21, 1
      %p107 = por %p105, %p106
      %p108 = scmp.ne.s32.totalorder %s97, %s98
      %p109 = scmp.eq.s32.totalorder %s21, 0
      %p110 = por %p108, %p109
      %p111 = scmp.ne.s32.totalorder %s97, %s98
      %p112 = scmp.eq.s32.totalorder %s22, 1
      %p113 = por %p111, %p112
      %p115 = scmp.ne.s32.totalorder %s98, %s114
      %p116 = scmp.eq.s32.totalorder %s22, 0
      %p117 = por %p115, %p116
      %p118 = scmp.le.s32.totalorder 1, %s16
      %p119 = scmp.lt.s32.totalorder %s16, 3
      %p120 = pnand %p118, %p119
      %p121 = pneg %p120
      // Predicated region
      $region9: #{tpu_custom_call.1} parent=5 // pred_check
        _
      $region10: #{tpu_custom_call.1} parent=5 // pred_check_branch
        %123 = sbr.rel (%p120) target = $region12
      $region11: #{tpu_custom_call.1} parent=5 // pred_region
        %s124 = ssub.s32 %s16, 1
        // Predicated region
        $region13: #{tpu_custom_call.1} parent=11 // pred_check
          %p125 = pneg %p63
        $region14: #{tpu_custom_call.1} parent=11 // pred_check_branch
          %127 = sbr.rel (%p125) target = $region16
        $region15: #{tpu_custom_call.1} parent=11 // pred_region
          %s129 = ssub.s32 512, 512
          %130 = vsyncadd [#allocation6], %s129
          %s131 = sshll.u32 [#allocation5], 4
          %s132 = int_to_ptr.vmem [resolvable:$true] %s131
          %137 = dma.hbm_to_vmem [thread:$0]  %s1, 512, %s132, [#allocation6], 64, 64, 4
        $region16: #{tpu_custom_call.1} parent=11 // pred_fallthru
          _
        // Predicated region
        $region17: #{tpu_custom_call.1} parent=11 // pred_check
          %p138 = pneg %p84
        $region18: #{tpu_custom_call.1} parent=11 // pred_check_branch
          %140 = sbr.rel (%p138) target = $region20
        $region19: #{tpu_custom_call.1} parent=11 // pred_region
          _
        $region20: #{tpu_custom_call.1} parent=11 // pred_fallthru
          _
      $region12: #{tpu_custom_call.1} parent=5 // pred_fallthru
        _
      %p141 = scmp.lt.s32.totalorder %s16, 2
      // Predicated region
      $region21: #{tpu_custom_call.1} parent=5 // pred_check
        %p142 = pneg %p141
      $region22: #{tpu_custom_call.1} parent=5 // pred_check_branch
        %144 = sbr.rel (%p142) target = $region24
      $region23: #{tpu_custom_call.1} parent=5 // pred_region
        // Predicated region
        $region25: #{tpu_custom_call.1} parent=23 // pred_check
          %p145 = pneg %p36
        $region26: #{tpu_custom_call.1} parent=23 // pred_check_branch
          %147 = sbr.rel (%p145) target = $region28
        $region27: #{tpu_custom_call.1} parent=23 // pred_region
          %s148 = sand.u32 %s26, 1
          %s149 = scalar_lea.sflag [#allocation3], %s148
          %s150 = sand.u32 %s26, 1
          %s151 = smul.addr %s150, 16
          %s152 = scalar_lea.vmem [#allocation2], %s151
          %s153 = smul.u32 2, %s16
          %s155 = ssub.s32 256, 256
          %156 = vsyncadd %s149, %s155
          %s157 = smul.addr %s153, 128
          %s158 = scalar_lea.hbm %s0, %s157
          %s159 = sshll.u32 %s152, 4
          %s160 = int_to_ptr.vmem [resolvable:$true] %s159
          %165 = dma.hbm_to_vmem [thread:$0]  %s158, 256, %s160, %s149, 128, 128, 8
        $region28: #{tpu_custom_call.1} parent=23 // pred_fallthru
          _
      $region24: #{tpu_custom_call.1} parent=5 // pred_fallthru
        _
      %p166 = scmp.le.s32.totalorder 1, %s16
      %p167 = scmp.lt.s32.totalorder %s16, 3
      %p168 = pnand %p166, %p167
      %p169 = pneg %p168
      // Predicated region
      $region29: #{tpu_custom_call.1} parent=5 // pred_check
        _
      $region30: #{tpu_custom_call.1} parent=5 // pred_check_branch
        %171 = sbr.rel (%p168) target = $region32
      $region31: #{tpu_custom_call.1} parent=5 // pred_region
        %s172 = ssub.s32 %s16, 1
        %s173 = sand.u32 %s29, 1
        %s174 = scalar_lea.sflag [#allocation3], %s173
        %s175 = sand.u32 %s29, 1
        %s176 = smul.addr %s175, 16
        %s177 = scalar_lea.vmem [#allocation2], %s176
        // Predicated region
        $region33: #{tpu_custom_call.1} parent=31 // pred_check
          %p178 = pneg %p42
        $region34: #{tpu_custom_call.1} parent=31 // pred_check_branch
          %180 = sbr.rel (%p178) target = $region36
        $region35: #{tpu_custom_call.1} parent=31 // pred_region
          %181 = dma.done %s174, 256
        $region36: #{tpu_custom_call.1} parent=31 // pred_fallthru
          _
        // Predicated region
        $region37: #{tpu_custom_call.1} parent=31 // pred_check
          %p182 = pneg %p63
        $region38: #{tpu_custom_call.1} parent=31 // pred_check_branch
          %184 = sbr.rel (%p182) target = $region40
        $region39: #{tpu_custom_call.1} parent=31 // pred_region
          %185 = dma.done [#allocation6], 512
        $region40: #{tpu_custom_call.1} parent=31 // pred_fallthru
          _
        %s186 = sand.u32 %s29, 1
        %s187 = scalar_lea.sflag [#allocation3], %s186
        %s188 = sand.u32 %s29, 1
        %s189 = smul.addr %s188, 16
        %s190 = scalar_lea.vmem [#allocation2], %s189
        %p191 = pneg %p42
        %p192 = pneg %p39
        %p193 = pneg %p63
        %p194 = pneg %p60
        %p195 = pneg %p84
        %p196 = pneg %p81
        %p197 = pneg %p110
        %p198 = pneg %p107
        %s199 = sand.u32 %s97, 1
        %s200 = scalar_lea.sflag [#allocation4], %s199
        %s201 = sand.u32 %s97, 1
        %s202 = smul.addr %s201, 16
        %s203 = scalar_lea.vmem [#allocation7], %s202
        %s204 = smul.u32 2, %s21
        %s205 = smul.u32 2, %s21
        %v207 = vld [vmem:[%s177] sm:$0xff]
        %v208 = vld [vmem:[%s177 + $0x8] sm:$0xff]
        %v209 = vpack.c.bf16 %v208, %v207
        %v210 = vld [vmem:[#allocation5] sm:$0xf]
        %v211 = vld [vmem:[#allocation5 + $0x4] sm:$0xf]
        %v212 = vld [vmem:[#allocation5 + $0x8] sm:$0xf]
        %v213 = vld [vmem:[#allocation5 + $0xc] sm:$0xf]
        %v214 = vld [vmem:[#allocation5 + $0x10] sm:$0xf]
        %v215 = vld [vmem:[#allocation5 + $0x14] sm:$0xf]
        %v216 = vld [vmem:[#allocation5 + $0x18] sm:$0xf]
        %v217 = vld [vmem:[#allocation5 + $0x1c] sm:$0xf]
        %v218 = vld [vmem:[%s2] sm:$0x1]
        %v220 = vlaneseq
        %v221 = vshrl.u32 %v220, 7
        %v222 = vsub.s32 0, %v221
        %v223 = vrot.slane %v218, %v222
        %v233 = vunpack.c.l.b16 %v210
        %v234 = vunpack.c.l.b16 %v211
        %v235 = vunpack.c.l.b16 %v212
        %v236 = vunpack.c.l.b16 %v213
        %v237 = vunpack.c.l.b16 %v214
        %v238 = vunpack.c.l.b16 %v215
        %v239 = vunpack.c.l.b16 %v216
        %v240 = vunpack.c.l.b16 %v217
        %v241 = vpack.c.b16 %v234, %v233
        %v242 = vpack.c.b16 %v236, %v235
        %v243 = vpack.c.b16 %v238, %v237
        %v244 = vpack.c.b16 %v240, %v239
        %vm249 = vcmask 523264
        %v251 = vsel %vm249, %v209, 0
        %253 = vmatprep.subr.bf16.mxu0 0
        %254 = vmatpush1.bf16.msra.mxu0 %v241
        %255 = vmatprep.subr.bf16.mxu0 0
        %256 = vmatpush1.bf16.msra.mxu0 %v242
        %257 = vmatprep.subr.bf16.mxu0 0
        %258 = vmatpush1.bf16.msra.mxu0 %v243
        %259 = vmatprep.subr.bf16.mxu0 0
        %260 = vmatpush1.bf16.msra.mxu0 %v244
        %261 = vmatprep.subr.bf16.mxu0 0
        %262 = vmatpush1.bf16.msra.mxu0 0
        %263 = vmatprep.subr.bf16.mxu0 0
        %264 = vmatpush1.bf16.msra.mxu0 0
        %265 = vmatprep.subr.bf16.mxu0 0
        %266 = vmatpush1.bf16.msra.mxu0 0
        %267 = vmatprep.subr.bf16.mxu0 0
        %268 = vmatpush1.bf16.msra.mxu0 0
        %269 = vmatprep.subr.bf16.mxu0 0
        %270 = vmatpush1.bf16.msra.mxu0 0
        %271 = vmatprep.subr.bf16.mxu0 0
        %272 = vmatpush1.bf16.msra.mxu0 0
        %273 = vmatprep.subr.bf16.mxu0 0
        %274 = vmatpush1.bf16.msra.mxu0 0
        %275 = vmatprep.subr.bf16.mxu0 0
        %276 = vmatpush1.bf16.msra.mxu0 0
        %277 = vmatprep.subr.bf16.mxu0 0
        %278 = vmatpush1.bf16.msra.mxu0 0
        %279 = vmatprep.subr.bf16.mxu0 0
        %280 = vmatpush1.bf16.msra.mxu0 0
        %281 = vmatprep.subr.bf16.mxu0 0
        %282 = vmatpush1.bf16.msra.mxu0 0
        %283 = vmatprep.subr.bf16.mxu0 0
        %284 = vmatpush1.bf16.msra.mxu0 0
        %285 = vmatprep.mubr.bf16.mxu0 0
        %286 = vmatmul.mubr.bf16.gmra.mrb[0].mxu0 %v251
        %v287 = vpop.f32.mrb[0].mxu0
        %v288 = vadd.f32 %v223, %v287
        %v289 = vpop.f32.mrb[0].mxu0
        %v290 = vpop.f32.mrb[0].mxu0
        %v291 = vadd.f32 %v223, %v290
        %v292 = vpop.f32.mrb[0].mxu0
        %293 = vdwg.mxu0
        %294 = vst [vmem:[%s203] sm:$0xff] %v288
        %295 = vst [vmem:[%s203 + $0x8] sm:$0xff] %v291
        %s296 = sand.u32 %s97, 1
        %s297 = scalar_lea.sflag [#allocation4], %s296
        %s298 = sand.u32 %s97, 1
        %s299 = smul.addr %s298, 16
        %s300 = scalar_lea.vmem [#allocation7], %s299
        // Predicated region
        $region41: #{tpu_custom_call.1} parent=31 // pred_check
          %p301 = pneg %p107
        $region42: #{tpu_custom_call.1} parent=31 // pred_check_branch
          %303 = sbr.rel (%p301) target = $region44
        $region43: #{tpu_custom_call.1} parent=31 // pred_region
          %s304 = smul.u32 2, %s21
          %s306 = ssub.s32 256, 256
          %307 = vsyncadd %s297, %s306
          %s308 = smul.addr %s304, 128
          %s309 = scalar_lea.hbm %s3, %s308
          %s310 = sshll.u32 %s300, 4
          %s311 = int_to_ptr.vmem [resolvable:$true] %s310
          %316 = dma.vmem_to_hbm [thread:$0]  %s311, 256, %s309, %s297, 128, 128, 8
        $region44: #{tpu_custom_call.1} parent=31 // pred_fallthru
          _
      $region32: #{tpu_custom_call.1} parent=5 // pred_fallthru
        _
      %p317 = scmp.le.s32.totalorder 2, %s16
      // Predicated region
      $region45: #{tpu_custom_call.1} parent=5 // pred_check
        %p318 = pneg %p317
      $region46: #{tpu_custom_call.1} parent=5 // pred_check_branch
        %320 = sbr.rel (%p318) target = $region48
      $region47: #{tpu_custom_call.1} parent=5 // pred_region
        %s321 = ssub.s32 %s16, 2
        // Predicated region
        $region49: #{tpu_custom_call.1} parent=47 // pred_check
          %p322 = pneg %p113
        $region50: #{tpu_custom_call.1} parent=47 // pred_check_branch
          %324 = sbr.rel (%p322) target = $region52
        $region51: #{tpu_custom_call.1} parent=47 // pred_region
          %s325 = sand.u32 %s98, 1
          %s326 = scalar_lea.sflag [#allocation4], %s325
          %s327 = sand.u32 %s98, 1
          %s328 = smul.addr %s327, 16
          %s329 = scalar_lea.vmem [#allocation7], %s328
          %330 = dma.done %s326, 256
        $region52: #{tpu_custom_call.1} parent=47 // pred_fallthru
          _
      $region48: #{tpu_custom_call.1} parent=5 // pred_fallthru
        _
    $region6: #{tpu_custom_call.1} parent=1 // loop_footer
      %s20 = sadd.s32 1, %s16
    $region7: #{tpu_custom_call.1} parent=1 // loop_footer_branch
      %15 = sbr.rel target = $region3
    $region8: #{tpu_custom_call.1} parent=1 // loop_exit
      _
    %331 = vsyncpa [#allocation3], 1
    %s332 = scalar_lea.sflag [#allocation3], 1
    %333 = vsyncpa %s332, 1
    %334 = vsyncpa [#allocation6], 1
    %335 = vsyncpa [#allocation4], 1
    %s336 = scalar_lea.sflag [#allocation4], 1
    %337 = vsyncpa %s336, 1

</llo_original>
